<compile_context>
chip_gen: v5e
topology: v5e:2x2
jax: 0.10.0
libtpu: 0.0.40
codegen_flags: <defaults>
</compile_context>

<pallas_src>
import jax
import jax.numpy as jnp
from jax.experimental import pallas as pl
from jax.experimental.pallas import tpu as pltpu


def _locked_dropout_kernel(mask_ref, x_ref, o_ref):
    # mask_ref: (1, BH) in x.dtype, already scaled by 1/keep_prob.
    # x_ref / o_ref: (Tt, BH). Pure elementwise multiply with sublane broadcast.
    o_ref[...] = x_ref[...] * mask_ref[...]


def _choose_time_tile(T, BH, itemsize, target_bytes=2 << 20):
    """Pick a time-tile Tt: full T if it fits ~2 MiB, else a multiple of 8."""
    row_bytes = max(1, BH * itemsize)
    if T * row_bytes <= target_bytes:
        return T
    tt = max(8, (target_bytes // row_bytes) // 8 * 8)
    return int(min(tt, T))


def locked_dropout(x, dropout, *, seed=0, training=True):
    """Pallas implementation of LockedDropout.forward.

    x: (T, B, H) array. Returns array of same shape/dtype.
    """
    if (not training) or (dropout == 0.0):
        return x

    T, B, H = x.shape
    BH = B * H
    keep_prob = 1.0 - float(dropout)

    # One locked mask of shape (1, B*H), scaled by 1/keep_prob, in x.dtype.
    key = jax.random.PRNGKey(seed)
    keep = jax.random.bernoulli(key, p=keep_prob, shape=(1, BH))
    mask = (keep.astype(jnp.float32) * jnp.float32(1.0 / keep_prob)).astype(x.dtype)

    x2d = x.reshape(T, BH)
    itemsize = jnp.dtype(x.dtype).itemsize
    Tt = _choose_time_tile(T, BH, itemsize)
    grid = (pl.cdiv(T, Tt),)

    out2d = pl.pallas_call(
        _locked_dropout_kernel,
        out_shape=jax.ShapeDtypeStruct((T, BH), x.dtype),
        grid=grid,
        in_specs=[
            pl.BlockSpec((1, BH), lambda t: (0, 0)),    # mask: same block every step
            pl.BlockSpec((Tt, BH), lambda t: (t, 0)),   # x: tile over time
        ],
        out_specs=pl.BlockSpec((Tt, BH), lambda t: (t, 0)),
        compiler_params=pltpu.CompilerParams(
            dimension_semantics=("parallel",)),
        cost_estimate=pl.CostEstimate(
            flops=T * BH,
            transcendentals=0,
            bytes_accessed=2 * T * BH * itemsize + BH * itemsize),
    )(mask, x2d)

    return out2d.reshape(T, B, H)


if __name__ == "__main__":
    key = jax.random.PRNGKey(0)
    T, B, H = 8, 4, 32            # seq=8, batch=4, hidden=32  (B*H = 128 lanes)
    dropout_p = 0.25

    x = jax.random.normal(key, (T, B, H), dtype=jnp.float32)

    out = locked_dropout(x, dropout_p, seed=0, training=True)
    out = jax.block_until_ready(out)

    # Sanity checks: each element is either 0 or x / keep_prob, and the mask is
    # identical ("locked") across the time dimension.
    keep_prob = 1.0 - dropout_p
    ratio = out / (x / keep_prob)                      # ~0 or ~1 per element
    mask_est = jnp.round(ratio)
    assert bool(jnp.all((mask_est == 0) | (mask_est == 1)))
    assert bool(jnp.all(mask_est == mask_est[0:1]))    # same mask every step

    # Eval / zero-dropout path returns x unchanged.
    out_eval = jax.block_until_ready(locked_dropout(x, dropout_p, training=False))
    assert bool(jnp.all(out_eval == x))
    out_nodrop = jax.block_until_ready(locked_dropout(x, 0.0, training=True))
    assert bool(jnp.all(out_nodrop == x))

    print("KERNEL_OK")
</pallas_src>

<mosaic_0001>
module attributes {stable_mosaic.version = 11 : i64} {
  func.func @_locked_dropout_kernel(%arg0: i32, %arg1: memref<1x128xf32, #tpu.memory_space<vmem>>, %arg2: memref<8x128xf32, #tpu.memory_space<vmem>>, %arg3: memref<8x128xf32, #tpu.memory_space<vmem>>) attributes {dimension_semantics = [#tpu.dimension_semantics<parallel>], iteration_bounds = array<i64: 1>, scalar_prefetch = 0 : i64, scratch_operands = 0 : i64, tpu.core_type = #tpu.core_type<tc>, window_params = [{pipeline_mode = #tpu.pipeline_mode<synchronous>, transform_indices = @transform_0, window_bounds = array<i64: 1, 128>}, {transform_indices = @transform_1, window_bounds = array<i64: 8, 128>}, {transform_indices = @transform_2, window_bounds = array<i64: 8, 128>}]} {
    %c0 = arith.constant 0 : index
    %c0_0 = arith.constant 0 : index
    %0 = vector.load %arg2[%c0, %c0_0] : memref<8x128xf32, #tpu.memory_space<vmem>>, vector<8x128xf32>
    %c0_1 = arith.constant 0 : index
    %c0_2 = arith.constant 0 : index
    %1 = vector.load %arg1[%c0_1, %c0_2] : memref<1x128xf32, #tpu.memory_space<vmem>>, vector<1x128xf32>
    %2 = vector.broadcast %1 : vector<1x128xf32> to vector<8x128xf32>
    %3 = arith.mulf %0, %2 : vector<8x128xf32>
    %c0_3 = arith.constant 0 : index
    %c0_4 = arith.constant 0 : index
    %4 = vector.load %arg3[%c0_3, %c0_4] : memref<8x128xf32, #tpu.memory_space<vmem>>, vector<8x128xf32>
    tpu.vector_store %arg3[%c0_3, %c0_4], %3 {strides = array<i32>} : memref<8x128xf32, #tpu.memory_space<vmem>>, vector<8x128xf32>,
    return
  }
  func.func @transform_0(%arg0: i32) -> (i32, i32) {
    %c0_i32 = arith.constant 0 : i32
    %c0_i32_0 = arith.constant 0 : i32
    %c0_i32_1 = arith.constant 0 : i32
    return %c0_i32, %c0_i32_0 : i32, i32
  }
  func.func @transform_1(%arg0: i32) -> (i32, i32) {
    %c0_i32 = arith.constant 0 : i32
    %c0_i32_0 = arith.constant 0 : i32
    return %arg0, %c0_i32 : i32, i32
  }
  func.func @transform_2(%arg0: i32) -> (i32, i32) {
    %c0_i32 = arith.constant 0 : i32
    %c0_i32_0 = arith.constant 0 : i32
    return %arg0, %c0_i32 : i32, i32
  }
}

</mosaic_0001>

<llo_original>
// kernel: tpu_custom_call.1
$region0: #{tpu_custom_call.1}
  #allocation0 [shape = 'u32[]', space=smem, size = 0x4, offset = 0x4, fixed_abs, tag = 'smem constant byte address 0x4 - core index']
  #allocation1 [shape = 'u32[72,128]{1,0:T(1,128)}', space=vmem, size = 0x9000, scoped, tag = 'internal scratch']
  %s0 = inlined_call_operand.hbm [shape: f32[1,128], index: 0, kind: input, shape index: {}]
  %s1 = inlined_call_operand.hbm [shape: f32[8,128], index: 1, kind: input, shape index: {}]
  %s2 = inlined_call_operand.hbm [shape: f32[8,128], index: 2, kind: output, shape index: {}]
  %s3 = sld [smem:[#allocation0]]
  $region26: #{tpu_custom_call.1} parent=0
    _
  %s5 = ssub.s32 1, %s3
  %s6 = scalar_select 0, %s5, %s3
  $region1: #{tpu_custom_call.1} parent=0
    #allocation2 [shape = 'u8[512]{0}', space=vmem, size = 0x400, scoped, tag = 'input window, operand 0, single buffered']
    #allocation3 [shape = 's32[1]{0}', space=sflag, size = 0x4, scoped, tag = 'scoped memory for tpu_custom_call.1']
    #allocation4 [shape = 's32[1]{0}', space=sflag, size = 0x4, scoped, tag = 'scoped memory for tpu_custom_call.1']
    #allocation5 [shape = 'u8[4096]{0}', space=vmem, size = 0x1000, scoped, tag = 'input window, operand 1, single buffered']
    #allocation6 [shape = 's32[1]{0}', space=sflag, size = 0x4, scoped, tag = 'scoped memory for tpu_custom_call.1']
    #allocation7 [shape = 'u8[4096]{0}', space=vmem, size = 0x1000, scoped, tag = 'output window, operand 0, single buffered']
    %7 = vsyncpa [#allocation3], 0
    %8 = vsyncpa [#allocation6], 0
    %9 = vsyncpa [#allocation4], 0
    // Predicated region
    $region2: #{tpu_custom_call.1} parent=1 // pred_check
      _
    $region3: #{tpu_custom_call.1} parent=1 // pred_check_branch
      %11 = sbr.rel (0) target = $region5
    $region4: #{tpu_custom_call.1} parent=1 // pred_region
      %13 = vsyncadd [#allocation3], 0
      %s15 = sshll.u32 %s0, 4
      %s16 = int_to_ptr.hbm [resolvable:$true] %s15
      %s17 = sshll.u32 [#allocation2], 4
      %s18 = int_to_ptr.vmem [resolvable:$true] %s17
      %20 = dma.hbm_to_vmem [thread:$0]  %s16, 16, %s18, [#allocation3]
    $region5: #{tpu_custom_call.1} parent=1 // pred_fallthru
      _
    // Predicated region
    $region6: #{tpu_custom_call.1} parent=1 // pred_check
      _
    $region7: #{tpu_custom_call.1} parent=1 // pred_check_branch
      %22 = sbr.rel (0) target = $region9
    $region8: #{tpu_custom_call.1} parent=1 // pred_region
      %24 = vsyncadd [#allocation6], 0
      %s26 = sshll.u32 %s1, 4
      %s27 = int_to_ptr.hbm [resolvable:$true] %s26
      %s28 = sshll.u32 [#allocation5], 4
      %s29 = int_to_ptr.vmem [resolvable:$true] %s28
      %31 = dma.hbm_to_vmem [thread:$0]  %s27, 128, %s29, [#allocation6]
    $region9: #{tpu_custom_call.1} parent=1 // pred_fallthru
      _
    // Predicated region
    $region10: #{tpu_custom_call.1} parent=1 // pred_check
      _
    $region11: #{tpu_custom_call.1} parent=1 // pred_check_branch
      %33 = sbr.rel (0) target = $region13
    $region12: #{tpu_custom_call.1} parent=1 // pred_region
      %35 = dma.done [#allocation3], 16
    $region13: #{tpu_custom_call.1} parent=1 // pred_fallthru
      _
    // Predicated region
    $region14: #{tpu_custom_call.1} parent=1 // pred_check
      _
    $region15: #{tpu_custom_call.1} parent=1 // pred_check_branch
      %37 = sbr.rel (0) target = $region17
    $region16: #{tpu_custom_call.1} parent=1 // pred_region
      %39 = dma.done [#allocation6], 128
    $region17: #{tpu_custom_call.1} parent=1 // pred_fallthru
      _
    %v40 = vld [vmem:[#allocation5] sm:$0xff]
    %v41 = vld [vmem:[#allocation2] sm:$0x1]
    %v43 = vperm.slane %v41, 0
    %v45 = vmul.f32 %v40, %v43
    %46 = vst [vmem:[#allocation7] sm:$0xff] %v45
    // Predicated region
    $region18: #{tpu_custom_call.1} parent=1 // pred_check
      _
    $region19: #{tpu_custom_call.1} parent=1 // pred_check_branch
      %48 = sbr.rel (0) target = $region21
    $region20: #{tpu_custom_call.1} parent=1 // pred_region
      %50 = vsyncadd [#allocation4], 0
      %s52 = sshll.u32 [#allocation7], 4
      %s53 = int_to_ptr.vmem [resolvable:$true] %s52
      %s54 = sshll.u32 %s2, 4
      %s55 = int_to_ptr.hbm [resolvable:$true] %s54
      %57 = dma.vmem_to_hbm [thread:$0]  %s53, 128, %s55, [#allocation4]
    $region21: #{tpu_custom_call.1} parent=1 // pred_fallthru
      _
    // Predicated region
    $region22: #{tpu_custom_call.1} parent=1 // pred_check
      _
    $region23: #{tpu_custom_call.1} parent=1 // pred_check_branch
      %59 = sbr.rel (0) target = $region25
    $region24: #{tpu_custom_call.1} parent=1 // pred_region
      %61 = dma.done [#allocation4], 128
    $region25: #{tpu_custom_call.1} parent=1 // pred_fallthru
      _
    %62 = vsyncpa [#allocation3], 1
    %63 = vsyncpa [#allocation6], 1
    %64 = vsyncpa [#allocation4], 1

</llo_original>
